<compile_context>
chip_gen: v5e
topology: v5e:2x2
jax: 0.10.0
libtpu: 0.0.40
codegen_flags: <defaults>
</compile_context>

<pallas_src>
import math
from functools import partial

import jax
import jax.numpy as jnp
from jax.experimental import pallas as pl
from jax.experimental.pallas import tpu as pltpu


# ------------------------------ fused kernel ---------------------------------
def _sinusoidal_kernel(time_ref, freqs_ref, out_ref, *, half_dim):
    # time_ref : (TB, 1)        f32
    # freqs_ref: (1, half_dim)  f32   (resident, same block every grid step)
    # out_ref  : (TB, dim)      f32
    t = time_ref[...]                      # (TB, 1)
    f = freqs_ref[...]                     # (1, half_dim)
    args = t * f                           # (TB, half_dim)  VPU broadcast-mul

    # Two direct slab stores instead of a concatenate: sin half then cos half.
    out_ref[:, :half_dim] = jnp.sin(args)
    out_ref[:, half_dim:] = jnp.cos(args)


def _pick_block_b(dim, budget_bytes=12 * 1024 * 1024):
    """Rows per tile so double-buffered in/out tiles fit the smallest scoped
    VMEM default (v5e 16 MiB); also fine on v7x's 64 MiB physical VMEM."""
    # f32 bytes per row: output (dim lanes) x2 buffers + time input padded to
    # 128 lanes x2 buffers.
    per_row = (dim * 4) * 2 + (128 * 4) * 2
    tb = budget_bytes // per_row
    tb = (tb // 8) * 8                     # f32 sublane multiple
    return max(8, min(4096, tb))


# ----------------------------- module equivalent ------------------------------
class SinusoidalPositionEmbeddingsPallas:
    def __init__(self, dim):
        assert dim % 2 == 0, "dim must be even"
        self.dim = dim
        self.half_dim = dim // 2
        # NOTE: matches the PyTorch reference; divides by zero when dim == 2.
        self.scale = math.log(10000.0) / (self.half_dim - 1)
        self.block_b = _pick_block_b(dim)
        # Host-precomputed frequency table (compile-time constant data).
        self._freqs = jnp.exp(
            jnp.arange(self.half_dim, dtype=jnp.float32) * -self.scale
        ).reshape(1, self.half_dim)

    def __call__(self, time):
        # time: (B,) any numeric dtype -> f32 math like the torch reference.
        B = time.shape[0]
        t2d = time.astype(jnp.float32).reshape(B, 1)
        kernel = partial(_sinusoidal_kernel, half_dim=self.half_dim)

        if B <= self.block_b:
            # Tiny-batch path: one block, one grid step, no padding.
            return pl.pallas_call(
                kernel,
                out_shape=jax.ShapeDtypeStruct((B, self.dim), jnp.float32),
            )(t2d, self._freqs)

        # Batch-tiled path.
        TB = self.block_b
        Bp = pl.cdiv(B, TB) * TB
        if Bp != B:
            t2d = jnp.pad(t2d, ((0, Bp - B), (0, 0)))

        out = pl.pallas_call(
            kernel,
            out_shape=jax.ShapeDtypeStruct((Bp, self.dim), jnp.float32),
            grid_spec=pltpu.PrefetchScalarGridSpec(
                num_scalar_prefetch=0,
                grid=(Bp // TB,),
                in_specs=[
                    pl.BlockSpec((TB, 1), lambda i: (i, 0)),
                    pl.BlockSpec((1, self.half_dim), lambda i: (0, 0)),
                ],
                out_specs=pl.BlockSpec((TB, self.dim), lambda i: (i, 0)),
            ),
            compiler_params=pltpu.CompilerParams(
                dimension_semantics=("parallel",),
            ),
        )(t2d, self._freqs)
        return out[:B] if Bp != B else out


# ------------------------------- reference ------------------------------------
def sinusoidal_ref(time, dim):
    half_dim = dim // 2
    scale = math.log(10000.0) / (half_dim - 1)
    freqs = jnp.exp(jnp.arange(half_dim, dtype=jnp.float32) * -scale)
    args = time.astype(jnp.float32)[:, None] * freqs[None, :]
    return jnp.concatenate([jnp.sin(args), jnp.cos(args)], axis=-1)


# ----------------------------------- main -------------------------------------
if __name__ == "__main__":
    key = jax.random.PRNGKey(0)

    # --- 1) test-scale workload: B=8, dim=32 (tiny / single-block path) ------
    B, DIM = 8, 32
    k0, k1 = jax.random.split(key)
    time_small = jax.random.uniform(k0, (B,), jnp.float32, 0.0, 100.0)

    mod_small = SinusoidalPositionEmbeddingsPallas(DIM)
    out_small = jax.block_until_ready(mod_small(time_small))
    ref_small = jax.block_until_ready(sinusoidal_ref(time_small, DIM))

    assert out_small.shape == (B, DIM)
    assert jnp.all(jnp.isfinite(out_small))
    assert jnp.allclose(out_small, ref_small, atol=1e-4, rtol=1e-4), (
        f"small: max abs err = {jnp.max(jnp.abs(out_small - ref_small))}"
    )
    assert jnp.allclose(
        out_small[:, :DIM // 2] ** 2 + out_small[:, DIM // 2:] ** 2, 1.0, atol=1e-4
    )

    # --- 2) gridded path: B not a tile multiple, lane-dense dim --------------
    B2, DIM2 = 4104, 256  # half_dim = 128 -> lane-aligned halves
    time_big = jax.random.uniform(k1, (B2,), jnp.float32, 0.0, 1000.0)

    mod_big = SinusoidalPositionEmbeddingsPallas(DIM2)
    out_big = jax.block_until_ready(mod_big(time_big))
    ref_big = jax.block_until_ready(sinusoidal_ref(time_big, DIM2))

    assert out_big.shape == (B2, DIM2)
    assert jnp.all(jnp.isfinite(out_big))
    assert jnp.allclose(out_big, ref_big, atol=1e-4, rtol=1e-4), (
        f"big: max abs err = {jnp.max(jnp.abs(out_big - ref_big))}"
    )

    print("KERNEL_OK")
</pallas_src>

<mosaic_0001>
module attributes {stable_mosaic.version = 11 : i64} {
  func.func @_sinusoidal_kernel(%arg0: memref<8x1xf32, #tpu.memory_space<vmem>>, %arg1: memref<1x16xf32, #tpu.memory_space<vmem>>, %arg2: memref<8x32xf32, #tpu.memory_space<vmem>>) attributes {dimension_semantics = [], scalar_prefetch = 0 : i64, scratch_operands = 0 : i64, tpu.core_type = #tpu.core_type<tc>} {
    %c0 = arith.constant 0 : index
    %c0_0 = arith.constant 0 : index
    %0 = vector.load %arg0[%c0, %c0_0] : memref<8x1xf32, #tpu.memory_space<vmem>>, vector<8x1xf32>
    %c0_1 = arith.constant 0 : index
    %c0_2 = arith.constant 0 : index
    %1 = vector.load %arg1[%c0_1, %c0_2] : memref<1x16xf32, #tpu.memory_space<vmem>>, vector<1x16xf32>
    %2 = vector.broadcast %0 : vector<8x1xf32> to vector<8x16xf32>
    %3 = vector.broadcast %1 : vector<1x16xf32> to vector<8x16xf32>
    %4 = arith.mulf %2, %3 : vector<8x16xf32>
    %5 = math.sin %4 : vector<8x16xf32>
    %c0_3 = arith.constant 0 : index
    %c0_4 = arith.constant 0 : index
    %6 = vector.load %arg2[%c0_3, %c0_4] : memref<8x32xf32, #tpu.memory_space<vmem>>, vector<8x16xf32>
    tpu.vector_store %arg2[%c0_3, %c0_4], %5 {strides = array<i32>} : memref<8x32xf32, #tpu.memory_space<vmem>>, vector<8x16xf32>,
    %7 = math.cos %4 : vector<8x16xf32>
    %c0_5 = arith.constant 0 : index
    %c16 = arith.constant 16 : index
    %8 = vector.load %arg2[%c0_5, %c16] : memref<8x32xf32, #tpu.memory_space<vmem>>, vector<8x16xf32>
    tpu.vector_store %arg2[%c0_5, %c16], %7 {strides = array<i32>} : memref<8x32xf32, #tpu.memory_space<vmem>>, vector<8x16xf32>,
    return
  }
}

</mosaic_0001>

<llo_original>
// kernel: tpu_custom_call.1
$region0: #{tpu_custom_call.1}
  #allocation0 [shape = 'u32[]', space=smem, size = 0x4, offset = 0x4, fixed_abs, tag = 'smem constant byte address 0x4 - core index']
  #allocation1 [shape = 'u32[72,128]{1,0:T(1,128)}', space=vmem, size = 0x9000, scoped, tag = 'internal scratch']
  %s0 = inlined_call_operand.vmem [shape: f32[8,1], index: 0, kind: input, shape index: {}]
  %s1 = inlined_call_operand.vmem [shape: f32[1,16], index: 1, kind: input, shape index: {}]
  %s2 = inlined_call_operand.hbm [shape: f32[8,32], index: 2, kind: output, shape index: {}]
  %s3 = sld [smem:[#allocation0]]
  $region18: #{tpu_custom_call.1} parent=0
    _
  %s5 = ssub.s32 1, %s3
  %s6 = scalar_select 0, %s5, %s3
  $region1: #{tpu_custom_call.1} parent=0
    #allocation2 [shape = 'u8[4096]{0}', space=vmem, size = 0x1000, scoped, tag = 'output window, operand 0, single buffered']
    #allocation3 [shape = 's32[1]{0}', space=sflag, size = 0x4, scoped, tag = 'scoped memory for tpu_custom_call.1']
    %7 = vsyncpa [#allocation3], 0
    // Predicated region
    $region2: #{tpu_custom_call.1} parent=1 // pred_check
      _
    $region3: #{tpu_custom_call.1} parent=1 // pred_check_branch
      %9 = sbr.rel (0) target = $region5
    $region4: #{tpu_custom_call.1} parent=1 // pred_region
      _
    $region5: #{tpu_custom_call.1} parent=1 // pred_fallthru
      _
    // Predicated region
    $region6: #{tpu_custom_call.1} parent=1 // pred_check
      _
    $region7: #{tpu_custom_call.1} parent=1 // pred_check_branch
      %11 = sbr.rel (0) target = $region9
    $region8: #{tpu_custom_call.1} parent=1 // pred_region
      _
    $region9: #{tpu_custom_call.1} parent=1 // pred_fallthru
      _
    %v12 = vld [vmem:[%s0] sm:$0xff]
    %v13 = vld [vmem:[%s1] sm:$0x1]
    %15 = vset.pattern.permute.xlu0 0
    %16 = vperm.xlu0 %15, %v12
    %v17 = vpop.permute.xlu0 %16
    %v20 = vperm.slane %v13, 0
    %v22 = vmul.f32 %v17, %v20
    %v23 = vand.u32 2147483647, %v22
    %vm24 = vcmp.le.f32.partialorder %v23, 0.7853982
    %vm25 = vcmp.lt.s32.totalorder %v22, 0
    %v26 = vand.u32 %v22, 2139095040
    %v27 = vshrl.u32 %v26, 23
    %v28 = vsub.s32 %v27, 127
    %v29 = vand.u32 2147483647, %v22
    %v30 = vand.u32 %v29, 8388607
    %v31 = vor.u32 %v30, 8388608
    %v32 = vsub.s32 0, %v31
    %v33 = vadd.s32 %v28, 1
    %vm34 = vcmp.gt.s32.totalorder %v33, 0
    %v35 = vsel %vm34, %v33, 0
    %v36 = vshrl.u32 %v35, 5
    %v37 = vand.u32 %v35, 31
    %v38 = vsub.s32 32, %v37
    %v39 = vshrl.u32 683565275, %v38
    %v40 = vshll.u32 683565275, %v37
    %v41 = vshrl.u32 2475754826, %v38
    %v42 = vor.u32 %v40, %v41
    %v43 = vshll.u32 2475754826, %v37
    %v44 = vshrl.u32 2131351028, %v38
    %v45 = vor.u32 %v43, %v44
    %v46 = vshll.u32 2131351028, %v37
    %v47 = vshrl.u32 2102212464, %v38
    %v48 = vor.u32 %v46, %v47
    %v49 = vshll.u32 2102212464, %v37
    %v50 = vshrl.u32 920167782, %v38
    %v51 = vor.u32 %v49, %v50
    %v52 = vshll.u32 920167782, %v37
    %v53 = vshrl.u32 1326507024, %v38
    %v54 = vor.u32 %v52, %v53
    %vm55 = vcmp.lt.s32.totalorder %v36, 1
    %vm56 = vcmp.lt.s32.totalorder %v36, 2
    %vm57 = vcmp.lt.s32.totalorder %v36, 3
    %vm58 = vcmp.lt.s32.totalorder %v36, 4
    %v59 = vsel %vm55, %v39, %v42
    %v60 = vsel %vm58, %v48, 2102212464
    %v61 = vsel %vm57, %v45, %v60
    %v62 = vsel %vm56, %v59, %v61
    %v63 = vsel %vm55, %v42, %v45
    %v64 = vsel %vm58, %v51, 920167782
    %v65 = vsel %vm57, %v48, %v64
    %v66 = vsel %vm56, %v63, %v65
    %v67 = vsel %vm55, %v45, %v48
    %v68 = vsel %vm58, %v54, 1326507024
    %v69 = vsel %vm57, %v51, %v68
    %v70 = vsel %vm56, %v67, %v69
    %v71 = vshll.u32 %v31, 8
    %v72 = vand.u32 %v71, 65535
    %v73 = vshrl.u32 %v71, 16
    %v74 = vand.u32 %v70, 65535
    %v75 = vshrl.u32 %v70, 16
    %v76 = vmul.u32 %v72, %v74
    %v77 = vmul.u32 %v72, %v75
    %v78 = vmul.u32 %v73, %v74
    %v79 = vmul.u32 %v73, %v75
    %v80 = vshll.u32 %v77, 16
    %v81 = vshrl.u32 %v77, 16
    %v82 = vshll.u32 %v78, 16
    %v83 = vshrl.u32 %v78, 16
    %vm84 = vc.u32 %v76, %v80
    %v85 = vsel %vm84, 1, 0
    %v86 = vadd.s32 %v76, %v80
    %v87 = vadd.s32 %v79, %v85
    %vm88 = vc.u32 %v86, %v82
    %v89 = vsel %vm88, 1, 0
    %v90 = vadd.s32 %v86, %v82
    %v91 = vadd.s32 %v87, %v89
    %v92 = vadd.s32 %v91, %v81
    %v93 = vadd.s32 %v92, %v83
    %v94 = vand.u32 %v71, 65535
    %v95 = vshrl.u32 %v71, 16
    %v96 = vand.u32 %v66, 65535
    %v97 = vshrl.u32 %v66, 16
    %v98 = vmul.u32 %v94, %v96
    %v99 = vmul.u32 %v94, %v97
    %v100 = vmul.u32 %v95, %v96
    %v101 = vmul.u32 %v95, %v97
    %v102 = vshll.u32 %v99, 16
    %v103 = vshrl.u32 %v99, 16
    %v104 = vshll.u32 %v100, 16
    %v105 = vshrl.u32 %v100, 16
    %vm106 = vc.u32 %v98, %v102
    %v107 = vsel %vm106, 1, 0
    %v108 = vadd.s32 %v98, %v102
    %v109 = vadd.s32 %v101, %v107
    %vm110 = vc.u32 %v108, %v104
    %v111 = vsel %vm110, 1, 0
    %v112 = vadd.s32 %v108, %v104
    %v113 = vadd.s32 %v109, %v111
    %v114 = vadd.s32 %v113, %v103
    %v115 = vadd.s32 %v114, %v105
    %v116 = vmul.u32 %v71, %v62
    %v117 = vadd.s32 %v93, %v112
    %vm118 = vc.u32 %v93, %v112
    %v119 = vadd.s32 %v115, 1
    %v120 = vsel %vm118, %v119, %v115
    %v121 = vadd.s32 %v116, %v120
    %v122 = vadd.s32 %v121, 536870912
    %v123 = vshrl.u32 %v122, 30
    %v124 = vshll.u32 %v123, 30
    %v125 = vsub.s32 %v121, %v124
    %vm126 = vcmp.lt.s32.totalorder %v125, 0
    %v127 = vsub.s32 0, %v125
    %v128 = vsel %vm126, %v127, %v125
    %v129 = vclz %v128
    %v130 = vsub.s32 %v129, 2
    %vm131 = vcmp.gt.s32.totalorder 0, %v130
    %v132 = vsel %vm131, 0, %v130
    %v133 = vsub.s32 32, %v132
    %v134 = vshll.u32 %v125, %v132
    %v135 = vshrl.u32 %v117, %v133
    %v136 = vor.u32 %v134, %v135
    %v137 = vsub.s32 4294967266, %v132
    %v138 = vadd.s32 %v137, 127
    %v139 = vshll.u32 %v138, 23
    %v140 = vor.u32 4788187, %v139
    %v141 = vand.u32 2147483647, %v140
    %v143 = vcvt.s32.f32 %v136
    %v144 = vmul.f32 %v143, %v141
    %v145 = vxor.u32 %v144, 2147483648
    %v146 = vsel %vm25, %v145, %v144
    %v147 = vsub.s32 4, %v123
    %v148 = vsel %vm25, %v147, %v123
    %v149 = vsel %vm24, %v22, %v146
    %v150 = vsel %vm24, 0, %v148
    %v151 = vmul.f32 %v149, %v149
    %v152 = vmul.f32 %v151, -0.001358992
    %v153 = vadd.f32 %v152, 0.041655596
    %v154 = vmul.f32 %v151, %v153
    %v155 = vadd.f32 %v154, -0.4999988
    %v156 = vmul.f32 %v151, %v155
    %v157 = vadd.f32 1.0, %v156
    %v158 = vmul.f32 %v149, %v149
    %v159 = vmul.f32 %v158, -0.00019511016
    %v160 = vadd.f32 %v159, 0.008332121
    %v161 = vmul.f32 %v158, %v160
    %v162 = vadd.f32 %v161, -0.16666654
    %v163 = vmul.f32 %v158, %v162
    %v164 = vadd.f32 %v163, 1.0
    %v165 = vmul.f32 %v164, %v149
    %vm166 = vweird.f32 %v22
    %v167 = vadd.s32 %v150, 3
    %v168 = vand.u32 %v167, 3
    %vm169 = vcmp.lt.s32.totalorder %v168, 2
    %vm170 = vcmp.eq.s32.totalorder %v168, 0
    %v171 = vxor.u32 %v165, 2147483648
    %v172 = vsel %vm170, %v157, %v171
    %vm173 = vcmp.eq.s32.totalorder %v168, 2
    %v174 = vxor.u32 %v157, 2147483648
    %v175 = vsel %vm173, %v174, %v165
    %v176 = vsel %vm169, %v172, %v175
    %v177 = vsel %vm166, nan, %v176
    %vm178 = vcmask 130048
    %179 = vst.msk [vmem:[#allocation2] sm:$0xff] %vm178, %v177
    %v180 = vand.u32 2147483647, %v22
    %vm181 = vcmp.le.f32.partialorder %v180, 0.7853982
    %vm182 = vcmp.lt.s32.totalorder %v22, 0
    %v183 = vand.u32 %v22, 2139095040
    %v184 = vshrl.u32 %v183, 23
    %v185 = vsub.s32 %v184, 127
    %v186 = vand.u32 2147483647, %v22
    %v187 = vand.u32 %v186, 8388607
    %v188 = vor.u32 %v187, 8388608
    %v189 = vsub.s32 0, %v188
    %v190 = vadd.s32 %v185, 1
    %vm191 = vcmp.gt.s32.totalorder %v190, 0
    %v192 = vsel %vm191, %v190, 0
    %v193 = vshrl.u32 %v192, 5
    %v194 = vand.u32 %v192, 31
    %v195 = vsub.s32 32, %v194
    %v196 = vshrl.u32 683565275, %v195
    %v197 = vshll.u32 683565275, %v194
    %v198 = vshrl.u32 2475754826, %v195
    %v199 = vor.u32 %v197, %v198
    %v200 = vshll.u32 2475754826, %v194
    %v201 = vshrl.u32 2131351028, %v195
    %v202 = vor.u32 %v200, %v201
    %v203 = vshll.u32 2131351028, %v194
    %v204 = vshrl.u32 2102212464, %v195
    %v205 = vor.u32 %v203, %v204
    %v206 = vshll.u32 2102212464, %v194
    %v207 = vshrl.u32 920167782, %v195
    %v208 = vor.u32 %v206, %v207
    %v209 = vshll.u32 920167782, %v194
    %v210 = vshrl.u32 1326507024, %v195
    %v211 = vor.u32 %v209, %v210
    %vm212 = vcmp.lt.s32.totalorder %v193, 1
    %vm213 = vcmp.lt.s32.totalorder %v193, 2
    %vm214 = vcmp.lt.s32.totalorder %v193, 3
    %vm215 = vcmp.lt.s32.totalorder %v193, 4
    %v216 = vsel %vm212, %v196, %v199
    %v217 = vsel %vm215, %v205, 2102212464
    %v218 = vsel %vm214, %v202, %v217
    %v219 = vsel %vm213, %v216, %v218
    %v220 = vsel %vm212, %v199, %v202
    %v221 = vsel %vm215, %v208, 920167782
    %v222 = vsel %vm214, %v205, %v221
    %v223 = vsel %vm213, %v220, %v222
    %v224 = vsel %vm212, %v202, %v205
    %v225 = vsel %vm215, %v211, 1326507024
    %v226 = vsel %vm214, %v208, %v225
    %v227 = vsel %vm213, %v224, %v226
    %v228 = vshll.u32 %v188, 8
    %v229 = vand.u32 %v228, 65535
    %v230 = vshrl.u32 %v228, 16
    %v231 = vand.u32 %v227, 65535
    %v232 = vshrl.u32 %v227, 16
    %v233 = vmul.u32 %v229, %v231
    %v234 = vmul.u32 %v229, %v232
    %v235 = vmul.u32 %v230, %v231
    %v236 = vmul.u32 %v230, %v232
    %v237 = vshll.u32 %v234, 16
    %v238 = vshrl.u32 %v234, 16
    %v239 = vshll.u32 %v235, 16
    %v240 = vshrl.u32 %v235, 16
    %vm241 = vc.u32 %v233, %v237
    %v242 = vsel %vm241, 1, 0
    %v243 = vadd.s32 %v233, %v237
    %v244 = vadd.s32 %v236, %v242
    %vm245 = vc.u32 %v243, %v239
    %v246 = vsel %vm245, 1, 0
    %v247 = vadd.s32 %v243, %v239
    %v248 = vadd.s32 %v244, %v246
    %v249 = vadd.s32 %v248, %v238
    %v250 = vadd.s32 %v249, %v240
    %v251 = vand.u32 %v228, 65535
    %v252 = vshrl.u32 %v228, 16
    %v253 = vand.u32 %v223, 65535
    %v254 = vshrl.u32 %v223, 16
    %v255 = vmul.u32 %v251, %v253
    %v256 = vmul.u32 %v251, %v254
    %v257 = vmul.u32 %v252, %v253
    %v258 = vmul.u32 %v252, %v254
    %v259 = vshll.u32 %v256, 16
    %v260 = vshrl.u32 %v256, 16
    %v261 = vshll.u32 %v257, 16
    %v262 = vshrl.u32 %v257, 16
    %vm263 = vc.u32 %v255, %v259
    %v264 = vsel %vm263, 1, 0
    %v265 = vadd.s32 %v255, %v259
    %v266 = vadd.s32 %v258, %v264
    %vm267 = vc.u32 %v265, %v261
    %v268 = vsel %vm267, 1, 0
    %v269 = vadd.s32 %v265, %v261
    %v270 = vadd.s32 %v266, %v268
    %v271 = vadd.s32 %v270, %v260
    %v272 = vadd.s32 %v271, %v262
    %v273 = vmul.u32 %v228, %v219
    %v274 = vadd.s32 %v250, %v269
    %vm275 = vc.u32 %v250, %v269
    %v276 = vadd.s32 %v272, 1
    %v277 = vsel %vm275, %v276, %v272
    %v278 = vadd.s32 %v273, %v277
    %v279 = vadd.s32 %v278, 536870912
    %v280 = vshrl.u32 %v279, 30
    %v281 = vshll.u32 %v280, 30
    %v282 = vsub.s32 %v278, %v281
    %vm283 = vcmp.lt.s32.totalorder %v282, 0
    %v284 = vsub.s32 0, %v282
    %v285 = vsel %vm283, %v284, %v282
    %v286 = vclz %v285
    %v287 = vsub.s32 %v286, 2
    %vm288 = vcmp.gt.s32.totalorder 0, %v287
    %v289 = vsel %vm288, 0, %v287
    %v290 = vsub.s32 32, %v289
    %v291 = vshll.u32 %v282, %v289
    %v292 = vshrl.u32 %v274, %v290
    %v293 = vor.u32 %v291, %v292
    %v294 = vsub.s32 4294967266, %v289
    %v295 = vadd.s32 %v294, 127
    %v296 = vshll.u32 %v295, 23
    %v297 = vor.u32 4788187, %v296
    %v298 = vand.u32 2147483647, %v297
    %v300 = vcvt.s32.f32 %v293
    %v301 = vmul.f32 %v300, %v298
    %v302 = vxor.u32 %v301, 2147483648
    %v303 = vsel %vm182, %v302, %v301
    %v304 = vsub.s32 4, %v280
    %v305 = vsel %vm182, %v304, %v280
    %v306 = vsel %vm181, %v22, %v303
    %v307 = vsel %vm181, 0, %v305
    %v308 = vmul.f32 %v306, %v306
    %v309 = vmul.f32 %v308, -0.001358992
    %v310 = vadd.f32 %v309, 0.041655596
    %v311 = vmul.f32 %v308, %v310
    %v312 = vadd.f32 %v311, -0.4999988
    %v313 = vmul.f32 %v308, %v312
    %v314 = vadd.f32 1.0, %v313
    %v315 = vmul.f32 %v306, %v306
    %v316 = vmul.f32 %v315, -0.00019511016
    %v317 = vadd.f32 %v316, 0.008332121
    %v318 = vmul.f32 %v315, %v317
    %v319 = vadd.f32 %v318, -0.16666654
    %v320 = vmul.f32 %v315, %v319
    %v321 = vadd.f32 %v320, 1.0
    %v322 = vmul.f32 %v321, %v306
    %vm323 = vweird.f32 %v22
    %v324 = vand.u32 %v307, 3
    %vm325 = vcmp.lt.s32.totalorder %v324, 2
    %vm326 = vcmp.eq.s32.totalorder %v324, 0
    %v327 = vxor.u32 %v322, 2147483648
    %v328 = vsel %vm326, %v314, %v327
    %vm329 = vcmp.eq.s32.totalorder %v324, 2
    %v330 = vxor.u32 %v314, 2147483648
    %v331 = vsel %vm329, %v330, %v322
    %v332 = vsel %vm325, %v328, %v331
    %v333 = vsel %vm323, nan, %v332
    %335 = vrot.lane.b32.xlu0 %v333, 16
    %v336 = vpop.permute.xlu0 %335
    %vm338 = vcmask 261248
    %339 = vst.msk [vmem:[#allocation2] sm:$0xff] %vm338, %v336
    // Predicated region
    $region10: #{tpu_custom_call.1} parent=1 // pred_check
      _
    $region11: #{tpu_custom_call.1} parent=1 // pred_check_branch
      %341 = sbr.rel (0) target = $region13
    $region12: #{tpu_custom_call.1} parent=1 // pred_region
      %343 = vsyncadd [#allocation3], 0
      %s345 = sshll.u32 [#allocation2], 4
      %s346 = int_to_ptr.vmem [resolvable:$true] %s345
      %s347 = sshll.u32 %s2, 4
      %s348 = int_to_ptr.hbm [resolvable:$true] %s347
      %350 = dma.vmem_to_hbm [thread:$0]  %s346, 128, %s348, [#allocation3]
    $region13: #{tpu_custom_call.1} parent=1 // pred_fallthru
      _
    // Predicated region
    $region14: #{tpu_custom_call.1} parent=1 // pred_check
      _
    $region15: #{tpu_custom_call.1} parent=1 // pred_check_branch
      %352 = sbr.rel (0) target = $region17
    $region16: #{tpu_custom_call.1} parent=1 // pred_region
      %354 = dma.done [#allocation3], 128
    $region17: #{tpu_custom_call.1} parent=1 // pred_fallthru
      _
    %355 = vsyncpa [#allocation3], 1

</llo_original>
